<compile_context>
chip_gen: v5e
topology: v5e:2x2
jax: 0.10.0
libtpu: 0.0.40
codegen_flags: <defaults>
</compile_context>

<pallas_src>
import functools

import numpy as np
import jax
import jax.numpy as jnp
from jax.experimental import pallas as pl
from jax.experimental.pallas import tpu as pltpu


VGG16_CFG = [64, 64, 'M', 128, 128, 'M', 256, 256, 256, 'M',
             512, 512, 512, 'M', 512, 512, 512, 'M']

_VMEM_LIMIT = 48 * 1024 * 1024      # scoped VMEM limit (safe on v5e/v6e/v7x)
_TILE_BUDGET = 20 * 1024 * 1024     # double-buffered working-set budget


def _round_up(x, m):
    return ((x + m - 1) // m) * m


# ----------------------------------------------------------------------------
# Pallas GEMM kernels: out = relu?(x @ w + b), f32 accumulation on the MXU.
# ----------------------------------------------------------------------------
def _gemm_kernel_single(x_ref, w_ref, b_ref, o_ref, *, relu):
    # Single full-K block: no accumulator scratch, no revisit loop.
    acc = jnp.dot(x_ref[...], w_ref[...], preferred_element_type=jnp.float32)
    acc = acc + b_ref[...].astype(jnp.float32)
    if relu:
        acc = jnp.maximum(acc, 0.0)
    o_ref[...] = acc.astype(o_ref.dtype)


def _gemm_kernel_multi(x_ref, w_ref, b_ref, o_ref, acc_ref, *, relu):
    @pl.when(pl.program_id(2) == 0)
    def _():
        acc_ref[...] = jnp.zeros_like(acc_ref)

    acc_ref[...] += jnp.dot(x_ref[...], w_ref[...],
                            preferred_element_type=jnp.float32)

    @pl.when(pl.program_id(2) == pl.num_programs(2) - 1)
    def _():
        r = acc_ref[...] + b_ref[...].astype(jnp.float32)
        if relu:
            r = jnp.maximum(r, 0.0)
        o_ref[...] = r.astype(o_ref.dtype)


def _pick_tiles(M, K, Np, in_bytes):
    # N tiling: lane-dense, MXU-filling, always divides the pre-padded Np.
    if Np <= 512:
        tn = Np
    else:
        tn = 512 if Np % 512 == 0 else (256 if Np % 256 == 0 else 128)
    # K tiling: full-K block for every conv / fc7 / score / upscore (zero pad,
    # no reduction axis); fc6 (K = 25088 = 7 * 3584) gets an exactly-dividing tk.
    if K <= 4608:
        tk = K
    else:
        tk = 512
        for cand in (4096, 3584, 2048, 1024, 512):
            if K % cand == 0:
                tk = cand
                break
    # M tiling: adaptive (fc6/fc7/score have M = batch -> tiny tile, no waste).
    tm = min(1024, _round_up(M, 16))

    def footprint(tm_):
        # double-buffered inputs + double-buffered output + f32 accumulator
        return (2 * in_bytes * (tm_ * tk + tk * tn)
                + 2 * 2 * tm_ * tn + 4 * tm_ * tn)

    while tm > 16 and footprint(tm) > _TILE_BUDGET:
        tm = max(16, _round_up(tm // 2, 16))
    return tm, tk, tn


def pallas_matmul_bias(x, w, b, *, relu=False, out_dtype=jnp.bfloat16):
    """x: (M, K); w: (K, Np) pre-padded along N; b: (1, Np) f32 -> (M, Np)."""
    M, K = x.shape
    Kw, Np = w.shape
    assert K == Kw and Np % 128 == 0
    tm, tk, tn = _pick_tiles(M, K, Np, jnp.dtype(x.dtype).itemsize)
    assert K % tk == 0 and Np % tn == 0
    nk = K // tk
    Mp = _round_up(M, tm)
    xp = x if Mp == M else jnp.pad(x, ((0, Mp - M), (0, 0)))
    grid_m, grid_n = Mp // tm, Np // tn

    if nk == 1:
        out = pl.pallas_call(
            functools.partial(_gemm_kernel_single, relu=relu),
            out_shape=jax.ShapeDtypeStruct((Mp, Np), out_dtype),
            grid_spec=pltpu.PrefetchScalarGridSpec(
                num_scalar_prefetch=0,
                grid=(grid_m, grid_n),
                in_specs=[
                    pl.BlockSpec((tm, tk), lambda i, j: (i, 0)),
                    pl.BlockSpec((tk, tn), lambda i, j: (0, j)),
                    pl.BlockSpec((1, tn), lambda i, j: (0, j)),
                ],
                out_specs=pl.BlockSpec((tm, tn), lambda i, j: (i, j)),
            ),
            compiler_params=pltpu.CompilerParams(
                dimension_semantics=("parallel", "parallel"),
                vmem_limit_bytes=_VMEM_LIMIT),
        )(xp, w, b)
    else:
        out = pl.pallas_call(
            functools.partial(_gemm_kernel_multi, relu=relu),
            out_shape=jax.ShapeDtypeStruct((Mp, Np), out_dtype),
            grid_spec=pltpu.PrefetchScalarGridSpec(
                num_scalar_prefetch=0,
                grid=(grid_m, grid_n, nk),
                in_specs=[
                    pl.BlockSpec((tm, tk), lambda i, j, k: (i, k)),
                    pl.BlockSpec((tk, tn), lambda i, j, k: (k, j)),
                    pl.BlockSpec((1, tn), lambda i, j, k: (0, j)),
                ],
                out_specs=pl.BlockSpec((tm, tn), lambda i, j, k: (i, j)),
                scratch_shapes=[pltpu.VMEM((tm, tn), jnp.float32)],
            ),
            compiler_params=pltpu.CompilerParams(
                dimension_semantics=("parallel", "parallel", "arbitrary"),
                vmem_limit_bytes=_VMEM_LIMIT),
        )(xp, w, b)
    return out if Mp == M else out[:M]


# ----------------------------------------------------------------------------
# Conv / pool / transposed-conv built on the Pallas GEMM (NHWC activations)
# ----------------------------------------------------------------------------
def conv2d_nhwc(x, w, b, *, kh, kw, pad, oc, relu, out_dtype=jnp.bfloat16):
    """x: (N, H, W, C) bf16; w: (kh*kw*C, Np) GEMM layout; b: (1, Np). Stride 1."""
    N, H, W, C = x.shape
    if pad:
        x = jnp.pad(x, ((0, 0), (pad, pad), (pad, pad), (0, 0)))
    Hp, Wp = H + 2 * pad, W + 2 * pad
    Ho, Wo = Hp - kh + 1, Wp - kw + 1
    if kh == 1 and kw == 1:
        patches = x.reshape(N * Ho * Wo, C)
    else:
        # im2col in NHWC, (ky, kx)-major / C-minor column order (matches weights).
        # TODO(synk): fuse this into the GEMM kernel with a halo'd input block.
        cols = [x[:, ky:ky + Ho, kx:kx + Wo, :]
                for ky in range(kh) for kx in range(kw)]
        patches = jnp.concatenate(cols, axis=-1).reshape(N * Ho * Wo, kh * kw * C)
    out = pallas_matmul_bias(patches, w, b, relu=relu, out_dtype=out_dtype)
    return out[:, :oc].reshape(N, Ho, Wo, oc)


def maxpool2_ceil_nhwc(x):
    """2x2 max pool, stride 2, ceil_mode=True, NHWC (plain-JAX glue)."""
    N, H, W, C = x.shape
    Ho, Wo = -(-H // 2), -(-W // 2)
    return jax.lax.reduce_window(
        x, jnp.asarray(-jnp.inf, x.dtype), jax.lax.max,
        window_dimensions=(1, 2, 2, 1), window_strides=(1, 2, 2, 1),
        padding=((0, 0), (0, 2 * Ho - H), (0, 2 * Wo - W), (0, 0)))


def conv_transpose2d_nhwc(x, w, *, oc, kh, kw, stride):
    """x: (N, H, W, IC) f32; w: (IC, oc*kh*kw) f32; no bias, padding 0."""
    N, H, W, IC = x.shape
    Ho = (H - 1) * stride + kh
    Wo = (W - 1) * stride + kw
    y = pallas_matmul_bias(
        x.reshape(N * H * W, IC), w, jnp.zeros((1, w.shape[1]), jnp.float32),
        relu=False, out_dtype=jnp.float32)
    y = y.reshape(N, H, W, oc, kh, kw)
    out = jnp.zeros((N, Ho, Wo, oc), jnp.float32)
    assert kh % stride == 0 and kw % stride == 0
    # col2im: group kernel taps into (kh//stride, kw//stride) blocks; each block
    # is one dense vectorized overlap-add (4 adds total for the 64/32 up-conv).
    for by in range(kh // stride):
        for bx in range(kw // stride):
            blk = y[:, :, :, :, by * stride:(by + 1) * stride,
                    bx * stride:(bx + 1) * stride]
            blk = blk.transpose(0, 1, 4, 2, 5, 3).reshape(
                N, H * stride, W * stride, oc)
            out = out.at[:, by * stride:by * stride + H * stride,
                         bx * stride:bx * stride + W * stride, :].add(blk)
    return out


# ----------------------------------------------------------------------------
# Parameters (deterministic synthetic weights, pre-laid-out for the GEMM)
# ----------------------------------------------------------------------------
def get_upsampling_weight(in_channels, out_channels, kernel_size):
    factor = (kernel_size + 1) // 2
    if kernel_size % 2 == 1:
        center = factor - 1
    else:
        center = factor - 0.5
    og = np.ogrid[:kernel_size, :kernel_size]
    filt = (1 - abs(og[0] - center) / factor) * (1 - abs(og[1] - center) / factor)
    weight = np.zeros((in_channels, out_channels, kernel_size, kernel_size),
                      dtype=np.float64)
    weight[list(range(in_channels)), list(range(out_channels)), :, :] = filt
    return jnp.asarray(weight, dtype=jnp.float32)


def _make_conv_params(key, in_c, out_c, kh, kw, zero=False):
    """Weights generated directly in GEMM ((kh*kw*in_c), Np) bf16 layout,
    pre-padded along the output-channel axis (done once, outside the forward)."""
    K = kh * kw * in_c
    np_oc = _round_up(out_c, 128)
    if zero:
        w = jnp.zeros((K, np_oc), jnp.bfloat16)
    else:
        std = float(np.sqrt(2.0 / K))
        w = jax.random.normal(key, (K, out_c), jnp.bfloat16) * std
        if np_oc != out_c:
            w = jnp.pad(w, ((0, 0), (0, np_oc - out_c)))
    b = jnp.zeros((1, np_oc), jnp.float32)
    return (w, b)


def init_params(key, num_classes):
    convs = []
    in_c = 3
    for v in VGG16_CFG:
        if v == 'M':
            continue
        key, wk = jax.random.split(key)
        convs.append(_make_conv_params(wk, in_c, v, 3, 3))
        in_c = v
    key, k6, k7 = jax.random.split(key, 3)
    fc6 = _make_conv_params(k6, 512, 4096, 7, 7)
    fc7 = _make_conv_params(k7, 4096, 4096, 1, 1)
    score = _make_conv_params(None, 4096, num_classes, 1, 1, zero=True)
    up_w = get_upsampling_weight(num_classes, num_classes, 64)
    up_w = up_w.reshape(num_classes, num_classes * 64 * 64)   # (IC, OC*KH*KW) f32
    return {'convs': convs, 'fc6': fc6, 'fc7': fc7, 'score': score, 'up_w': up_w}


# ----------------------------------------------------------------------------
# Forward pass (mirrors FCN32.forward)
# ----------------------------------------------------------------------------
def fcn32_forward(params, x, *, num_classes):
    Nb, _, H, W = x.shape
    # NCHW -> NHWC once at the module boundary; activations are bf16 throughout.
    h = jnp.transpose(x, (0, 2, 3, 1)).astype(jnp.bfloat16)
    ci = 0
    first = True
    for v in VGG16_CFG:
        if v == 'M':
            h = maxpool2_ceil_nhwc(h)
        else:
            w, b = params['convs'][ci]
            h = conv2d_nhwc(h, w, b, kh=3, kw=3, pad=(100 if first else 1),
                            oc=v, relu=True)
            first = False
            ci += 1
    # score_fr head: fc6 -> ReLU -> Dropout -> fc7 -> ReLU -> Dropout -> score_fr
    w, b = params['fc6']
    h = conv2d_nhwc(h, w, b, kh=7, kw=7, pad=0, oc=4096, relu=True)
    # TODO(synk): nn.Dropout is implemented as identity (eval-mode semantics).
    w, b = params['fc7']
    h = conv2d_nhwc(h, w, b, kh=1, kw=1, pad=0, oc=4096, relu=True)
    w, b = params['score']
    h = conv2d_nhwc(h, w, b, kh=1, kw=1, pad=0, oc=num_classes, relu=False,
                    out_dtype=jnp.float32)
    up = conv_transpose2d_nhwc(h, params['up_w'], oc=num_classes, kh=64, kw=64,
                               stride=32)
    up = up[:, 19:19 + H, 19:19 + W, :]
    return jnp.transpose(up, (0, 3, 1, 2))


# ----------------------------------------------------------------------------
# Small correctness cross-check of the Pallas conv path vs an XLA reference
# ----------------------------------------------------------------------------
def _self_test_small_conv():
    key = jax.random.PRNGKey(42)
    kx, kw, kb = jax.random.split(key, 3)
    x = jax.random.normal(kx, (1, 9, 9, 8), jnp.bfloat16)
    w = jax.random.normal(kw, (3 * 3 * 8, 16), jnp.bfloat16) * 0.2
    b = jax.random.normal(kb, (1, 16), jnp.float32) * 0.1
    wp = jnp.pad(w, ((0, 0), (0, 128 - 16)))
    bp = jnp.pad(b, ((0, 0), (0, 128 - 16)))
    got = conv2d_nhwc(x, wp, bp, kh=3, kw=3, pad=1, oc=16, relu=True)
    ref = jax.lax.conv_general_dilated(
        x.astype(jnp.float32), w.astype(jnp.float32).reshape(3, 3, 8, 16),
        window_strides=(1, 1), padding=((1, 1), (1, 1)),
        dimension_numbers=('NHWC', 'HWIO', 'NHWC'))
    ref = jnp.maximum(ref + b.reshape(1, 1, 1, 16), 0.0)
    assert bool(jnp.allclose(got.astype(jnp.float32), ref,
                             atol=5e-2, rtol=5e-2)), "Pallas conv mismatch"


if __name__ == "__main__":
    _self_test_small_conv()

    num_classes = 7
    key = jax.random.PRNGKey(0)
    pkey, xkey = jax.random.split(key)
    params = init_params(pkey, num_classes)
    # Batch 1 keeps the (pad=100, VGG-sized) FCN32 forward well inside the
    # sandbox time budget; any batch size works.
    x = jax.random.normal(xkey, (1, 3, 16, 16), jnp.float32)

    fwd = jax.jit(functools.partial(fcn32_forward, num_classes=num_classes))
    out = jax.block_until_ready(fwd(params, x))

    assert out.shape == (1, num_classes, 16, 16), out.shape
    assert out.dtype == jnp.float32
    assert bool(jnp.all(jnp.isfinite(out)))
    print("KERNEL_OK")
</pallas_src>

<mosaic_0001>
module attributes {stable_mosaic.version = 11 : i64} {
  func.func @_gemm_kernel_single(%arg0: i32, %arg1: i32, %arg2: memref<96x72xbf16, #tpu.memory_space<vmem>>, %arg3: memref<72x128xbf16, #tpu.memory_space<vmem>>, %arg4: memref<1x128xf32, #tpu.memory_space<vmem>>, %arg5: memref<96x128xbf16, #tpu.memory_space<vmem>>) attributes {dimension_semantics = [#tpu.dimension_semantics<parallel>, #tpu.dimension_semantics<parallel>], iteration_bounds = array<i64: 1, 1>, scalar_prefetch = 0 : i64, scratch_operands = 0 : i64, tpu.core_type = #tpu.core_type<tc>, window_params = [{transform_indices = @transform_0, window_bounds = array<i64: 96, 72>}, {transform_indices = @transform_1, window_bounds = array<i64: 72, 128>}, {transform_indices = @transform_2, window_bounds = array<i64: 1, 128>}, {transform_indices = @transform_3, window_bounds = array<i64: 96, 128>}]} {
    %c0 = arith.constant 0 : index
    %c0_0 = arith.constant 0 : index
    %0 = vector.load %arg2[%c0, %c0_0] : memref<96x72xbf16, #tpu.memory_space<vmem>>, vector<96x72xbf16>
    %c0_1 = arith.constant 0 : index
    %c0_2 = arith.constant 0 : index
    %1 = vector.load %arg3[%c0_1, %c0_2] : memref<72x128xbf16, #tpu.memory_space<vmem>>, vector<72x128xbf16>
    %cst = arith.constant dense<0.000000e+00> : vector<96x128xf32>
    %2 = tpu.matmul %0, %1, %cst {dimension_numbers = #tpu.dot_dimension_numbers<[1], [0], [0], [1], [0, 0, 1, 1], [], []>} : vector<96x72xbf16>, vector<72x128xbf16>, vector<96x128xf32> -> vector<96x128xf32>
    %c0_3 = arith.constant 0 : index
    %c0_4 = arith.constant 0 : index
    %3 = vector.load %arg4[%c0_3, %c0_4] : memref<1x128xf32, #tpu.memory_space<vmem>>, vector<1x128xf32>
    %4 = vector.broadcast %3 : vector<1x128xf32> to vector<96x128xf32>
    %5 = arith.addf %2, %4 : vector<96x128xf32>
    %cst_5 = arith.constant 0.000000e+00 : f32
    %6 = vector.broadcast %cst_5 : f32 to vector<96x128xf32>
    %7 = arith.maximumf %5, %6 : vector<96x128xf32>
    %8 = arith.truncf %7 : vector<96x128xf32> to vector<96x128xbf16>
    %c0_6 = arith.constant 0 : index
    %c0_7 = arith.constant 0 : index
    %9 = vector.load %arg5[%c0_6, %c0_7] : memref<96x128xbf16, #tpu.memory_space<vmem>>, vector<96x128xbf16>
    tpu.vector_store %arg5[%c0_6, %c0_7], %8 {strides = array<i32>} : memref<96x128xbf16, #tpu.memory_space<vmem>>, vector<96x128xbf16>,
    return
  }
  func.func @transform_0(%arg0: i32, %arg1: i32) -> (i32, i32) {
    %c0_i32 = arith.constant 0 : i32
    %c0_i32_0 = arith.constant 0 : i32
    return %arg0, %c0_i32 : i32, i32
  }
  func.func @transform_1(%arg0: i32, %arg1: i32) -> (i32, i32) {
    %c0_i32 = arith.constant 0 : i32
    %c0_i32_0 = arith.constant 0 : i32
    return %c0_i32, %arg1 : i32, i32
  }
  func.func @transform_2(%arg0: i32, %arg1: i32) -> (i32, i32) {
    %c0_i32 = arith.constant 0 : i32
    %c0_i32_0 = arith.constant 0 : i32
    return %c0_i32, %arg1 : i32, i32
  }
  func.func @transform_3(%arg0: i32, %arg1: i32) -> (i32, i32) {
    %c0_i32 = arith.constant 0 : i32
    return %arg0, %arg1 : i32, i32
  }
}

</mosaic_0001>

<llo_original>
// kernel: tpu_custom_call.1
$region0: #{tpu_custom_call.1}
  #allocation0 [shape = 'u32[]', space=smem, size = 0x4, offset = 0x4, fixed_abs, tag = 'smem constant byte address 0x4 - core index']
  #allocation1 [shape = 'u32[72,128]{1,0:T(1,128)}', space=vmem, size = 0x9000, scoped, tag = 'internal scratch']
  %s0 = inlined_call_operand.vmem [shape: bf16[96,72], index: 0, kind: input, shape index: {}]
  %s1 = inlined_call_operand.vmem [shape: bf16[72,128], index: 1, kind: input, shape index: {}]
  %s2 = inlined_call_operand.vmem [shape: f32[1,128], index: 2, kind: input, shape index: {}]
  %s3 = inlined_call_operand.hbm [shape: bf16[96,128], index: 3, kind: output, shape index: {}]
  %s4 = sld [smem:[#allocation0]]
  $region22: #{tpu_custom_call.1} parent=0
    _
  %s6 = ssub.s32 1, %s4
  %s7 = scalar_select 0, %s6, %s4
  $region1: #{tpu_custom_call.1} parent=0
    #allocation2 [shape = 'u8[24576]{0}', space=vmem, size = 0x6000, scoped, tag = 'output window, operand 0, single buffered']
    #allocation3 [shape = 's32[1]{0}', space=sflag, size = 0x4, scoped, tag = 'scoped memory for tpu_custom_call.1']
    %8 = vsyncpa [#allocation3], 0
    // Predicated region
    $region2: #{tpu_custom_call.1} parent=1 // pred_check
      _
    $region3: #{tpu_custom_call.1} parent=1 // pred_check_branch
      %10 = sbr.rel (0) target = $region5
    $region4: #{tpu_custom_call.1} parent=1 // pred_region
      _
    $region5: #{tpu_custom_call.1} parent=1 // pred_fallthru
      _
    // Predicated region
    $region6: #{tpu_custom_call.1} parent=1 // pred_check
      _
    $region7: #{tpu_custom_call.1} parent=1 // pred_check_branch
      %12 = sbr.rel (0) target = $region9
    $region8: #{tpu_custom_call.1} parent=1 // pred_region
      _
    $region9: #{tpu_custom_call.1} parent=1 // pred_fallthru
      _
    // Predicated region
    $region10: #{tpu_custom_call.1} parent=1 // pred_check
      _
    $region11: #{tpu_custom_call.1} parent=1 // pred_check_branch
      %14 = sbr.rel (0) target = $region13
    $region12: #{tpu_custom_call.1} parent=1 // pred_region
      _
    $region13: #{tpu_custom_call.1} parent=1 // pred_fallthru
      _
    %v16 = vld [vmem:[%s0] sm:$0xf]
    %v17 = vld [vmem:[%s0 + $0x4] sm:$0xf]
    %v18 = vld [vmem:[%s0 + $0x8] sm:$0xf]
    %v19 = vld [vmem:[%s0 + $0xc] sm:$0xf]
    %v20 = vld [vmem:[%s0 + $0x10] sm:$0xf]
    %v21 = vld [vmem:[%s0 + $0x14] sm:$0xf]
    %v22 = vld [vmem:[%s0 + $0x18] sm:$0xf]
    %v23 = vld [vmem:[%s0 + $0x1c] sm:$0xf]
    %v24 = vld [vmem:[%s0 + $0x20] sm:$0xf]
    %v25 = vld [vmem:[%s0 + $0x24] sm:$0xf]
    %v26 = vld [vmem:[%s0 + $0x28] sm:$0xf]
    %v27 = vld [vmem:[%s0 + $0x2c] sm:$0xf]
    %v28 = vld [vmem:[%s1] sm:$0xf]
    %v29 = vld [vmem:[%s1 + $0x4] sm:$0xf]
    %v30 = vld [vmem:[%s1 + $0x8] sm:$0xf]
    %v31 = vld [vmem:[%s1 + $0xc] sm:$0xf]
    %v32 = vld [vmem:[%s1 + $0x10] sm:$0xf]
    %v33 = vld [vmem:[%s1 + $0x14] sm:$0xf]
    %v34 = vld [vmem:[%s1 + $0x18] sm:$0xf]
    %v35 = vld [vmem:[%s1 + $0x1c] sm:$0xf]
    %v36 = vld [vmem:[%s1 + $0x20] sm:$0xf]
    %v37 = vld [vmem:[%s2] sm:$0x1]
    %v39 = vperm.slane %v37, 0
    %v53 = vunpack.c.l.b16 %v16
    %v54 = vunpack.c.l.b16 %v17
    %v55 = vunpack.c.l.b16 %v18
    %v56 = vunpack.c.l.b16 %v19
    %v57 = vunpack.c.l.b16 %v20
    %v58 = vunpack.c.l.b16 %v21
    %v59 = vunpack.c.l.b16 %v22
    %v60 = vunpack.c.l.b16 %v23
    %v61 = vunpack.c.l.b16 %v24
    %v62 = vunpack.c.l.b16 %v25
    %v63 = vunpack.c.l.b16 %v26
    %v64 = vunpack.c.l.b16 %v27
    %v65 = vpack.c.b16 %v54, %v53
    %v66 = vpack.c.b16 %v56, %v55
    %v67 = vpack.c.b16 %v58, %v57
    %v68 = vpack.c.b16 %v60, %v59
    %v69 = vpack.c.b16 %v62, %v61
    %v70 = vpack.c.b16 %v64, %v63
    %v80 = vunpack.c.l.b16 %v28
    %v81 = vunpack.c.l.b16 %v29
    %v82 = vunpack.c.l.b16 %v30
    %v83 = vunpack.c.l.b16 %v31
    %v84 = vunpack.c.l.b16 %v32
    %v85 = vunpack.c.l.b16 %v33
    %v86 = vunpack.c.l.b16 %v34
    %v87 = vunpack.c.l.b16 %v35
    %v88 = vunpack.c.l.b16 %v36
    %v89 = vpack.c.b16 %v81, %v80
    %v90 = vpack.c.b16 %v83, %v82
    %v91 = vpack.c.b16 %v85, %v84
    %v92 = vpack.c.b16 %v87, %v86
    %v93 = vpack.c.b16 %v88, %v88
    %vm98 = vcmask 588800
    %v100 = vsel %vm98, %v65, 0
    %v103 = vsel %vm98, %v66, 0
    %v106 = vsel %vm98, %v67, 0
    %v109 = vsel %vm98, %v68, 0
    %v112 = vsel %vm98, %v69, 0
    %v115 = vsel %vm98, %v70, 0
    %vm117 = vcmask 1043456
    %v119 = vsel %vm117, %v93, 0
    %121 = vmatpush.bf16.msra.mxu0 0
    %122 = vmatpush.bf16.msra.mxu0 0
    %123 = vmatpush.bf16.msra.mxu0 0
    %124 = vmatpush.bf16.msra.mxu0 %v119
    %125 = vmatpush.bf16.msra.mxu0 %v92
    %126 = vmatpush.bf16.msra.mxu0 %v91
    %127 = vmatpush.bf16.msra.mxu0 %v90
    %128 = vmatpush.bf16.msra.mxu0 %v89
    %129 = vmatmul.bf16.gmra.mxu0 %v100
    %v130 = vpop.f32.mrf.mxu0
    %v131 = vadd.f32 %v39, %v130
    %v132 = vpop.f32.mrf.mxu0
    %v133 = vadd.f32 %v39, %v132
    %134 = vmatmul.bf16.gmra.mxu0 %v103
    %v135 = vpop.f32.mrf.mxu0
    %v136 = vadd.f32 %v39, %v135
    %v137 = vpop.f32.mrf.mxu0
    %v138 = vadd.f32 %v39, %v137
    %139 = vmatmul.bf16.gmra.mxu0 %v106
    %v140 = vpop.f32.mrf.mxu0
    %v141 = vadd.f32 %v39, %v140
    %v142 = vpop.f32.mrf.mxu0
    %v143 = vadd.f32 %v39, %v142
    %144 = vmatmul.bf16.gmra.mxu0 %v109
    %v145 = vpop.f32.mrf.mxu0
    %v146 = vadd.f32 %v39, %v145
    %v147 = vpop.f32.mrf.mxu0
    %v148 = vadd.f32 %v39, %v147
    %149 = vmatmul.bf16.gmra.mxu0 %v112
    %v150 = vpop.f32.mrf.mxu0
    %v151 = vadd.f32 %v39, %v150
    %v152 = vpop.f32.mrf.mxu0
    %v153 = vadd.f32 %v39, %v152
    %154 = vmatmul.bf16.gmra.mxu0 %v115
    %v155 = vpop.f32.mrf.mxu0
    %v156 = vadd.f32 %v39, %v155
    %v157 = vpop.f32.mrf.mxu0
    %v158 = vadd.f32 %v39, %v157
    %159 = vdwg.mxu0
    %v160 = vmax.f32 %v131, 0.0
    %v161 = vmax.f32 %v133, 0.0
    %v162 = vmax.f32 %v136, 0.0
    %v163 = vmax.f32 %v138, 0.0
    %v164 = vmax.f32 %v141, 0.0
    %v165 = vmax.f32 %v143, 0.0
    %v166 = vmax.f32 %v146, 0.0
    %v167 = vmax.f32 %v148, 0.0
    %v168 = vmax.f32 %v151, 0.0
    %v169 = vmax.f32 %v153, 0.0
    %v170 = vmax.f32 %v156, 0.0
    %v171 = vmax.f32 %v158, 0.0
    %v172 = vpack.c.bf16 %v160, %v160
    %v173 = vpack.c.bf16 %v161, %v161
    %v174 = vpack.c.bf16 %v162, %v162
    %v175 = vpack.c.bf16 %v163, %v163
    %v176 = vpack.c.bf16 %v164, %v164
    %v177 = vpack.c.bf16 %v165, %v165
    %v178 = vpack.c.bf16 %v166, %v166
    %v179 = vpack.c.bf16 %v167, %v167
    %v180 = vpack.c.bf16 %v168, %v168
    %v181 = vpack.c.bf16 %v169, %v169
    %v182 = vpack.c.bf16 %v170, %v170
    %v183 = vpack.c.bf16 %v171, %v171
    %184 = vst [vmem:[#allocation2] sm:$0xf] %v172
    %185 = vst [vmem:[#allocation2 + $0x4] sm:$0xf] %v173
    %186 = vst [vmem:[#allocation2 + $0x8] sm:$0xf] %v174
    %187 = vst [vmem:[#allocation2 + $0xc] sm:$0xf] %v175
    %188 = vst [vmem:[#allocation2 + $0x10] sm:$0xf] %v176
    %189 = vst [vmem:[#allocation2 + $0x14] sm:$0xf] %v177
    %190 = vst [vmem:[#allocation2 + $0x18] sm:$0xf] %v178
    %191 = vst [vmem:[#allocation2 + $0x1c] sm:$0xf] %v179
    %192 = vst [vmem:[#allocation2 + $0x20] sm:$0xf] %v180
    %193 = vst [vmem:[#allocation2 + $0x24] sm:$0xf] %v181
    %194 = vst [vmem:[#allocation2 + $0x28] sm:$0xf] %v182
    %195 = vst [vmem:[#allocation2 + $0x2c] sm:$0xf] %v183
    // Predicated region
    $region14: #{tpu_custom_call.1} parent=1 // pred_check
      _
    $region15: #{tpu_custom_call.1} parent=1 // pred_check_branch
      %197 = sbr.rel (0) target = $region17
    $region16: #{tpu_custom_call.1} parent=1 // pred_region
      %199 = vsyncadd [#allocation3], 0
      %s200 = sshll.u32 [#allocation2], 4
      %s201 = int_to_ptr.vmem [resolvable:$true] %s200
      %s202 = sshll.u32 %s3, 4
      %s203 = int_to_ptr.hbm [resolvable:$true] %s202
      %208 = dma.vmem_to_hbm [thread:$0]  %s201, 768, %s203, [#allocation3], 64, 64, 4
    $region17: #{tpu_custom_call.1} parent=1 // pred_fallthru
      _
    // Predicated region
    $region18: #{tpu_custom_call.1} parent=1 // pred_check
      _
    $region19: #{tpu_custom_call.1} parent=1 // pred_check_branch
      %210 = sbr.rel (0) target = $region21
    $region20: #{tpu_custom_call.1} parent=1 // pred_region
      %212 = dma.done [#allocation3], 768
    $region21: #{tpu_custom_call.1} parent=1 // pred_fallthru
      _
    %213 = vsyncpa [#allocation3], 1

</llo_original>
